<compile_context>
chip_gen: v7x
topology: tpu7x:2x2x1
jax: 0.10.0
libtpu: 0.0.40
codegen_flags: <defaults>
</compile_context>

<pallas_src>
import functools

import jax
import jax.numpy as jnp
from jax.experimental import pallas as pl
from jax.experimental.pallas import tpu as pltpu


# ----------------------------------------------------------------------------
# Parameter initialization (deterministic, PyTorch-default-style uniform init)
# Weights stored as [out_features, in_features], biases as [out_features, 1].
# ----------------------------------------------------------------------------
def init_params(layers, key):
    params = []
    for i in range(len(layers) - 1):
        fan_in, fan_out = layers[i], layers[i + 1]
        key, kw, kb = jax.random.split(key, 3)
        bound = 1.0 / jnp.sqrt(float(fan_in))
        W = jax.random.uniform(kw, (fan_out, fan_in), jnp.float32, -bound, bound)
        b = jax.random.uniform(kb, (fan_out, 1), jnp.float32, -bound, bound)
        params.append((W, b))
    return params


def _round_up(x, m):
    return (x + m - 1) // m * m


# ----------------------------------------------------------------------------
# Pack all (W, b) pairs into a single lane-aligned f32 slab.
# Layer l with W [out, in], b [out, 1] occupies rows [off_l, off_l + out):
#   W in cols [0, in), b in col `in`.
# Row offsets are 8-aligned (sublane tile); cols padded to 128 (lane tile).
# Returns (slab, layout) with layout = tuple of (row_off, fan_in, fan_out).
# ----------------------------------------------------------------------------
def pack_params(params):
    layout = []
    off = 0
    max_cols = 0
    for (W, _b) in params:
        fan_out, fan_in = W.shape
        layout.append((off, fan_in, fan_out))
        off += _round_up(fan_out, 8)
        max_cols = max(max_cols, fan_in + 1)
    rows = _round_up(max(off, 8), 8)
    cols = _round_up(max_cols, 128)
    slab = jnp.zeros((rows, cols), jnp.float32)
    for (row_off, fan_in, fan_out), (W, b) in zip(layout, params):
        slab = slab.at[row_off:row_off + fan_out, 0:fan_in].set(W)
        slab = slab.at[row_off:row_off + fan_out, fan_in:fan_in + 1].set(b)
    return slab, tuple(layout)


# ----------------------------------------------------------------------------
# Pallas kernel: fused MLP forward over one batch tile (batch on lanes)
# ----------------------------------------------------------------------------
def _make_mlp_kernel(layout):
    num_layers = len(layout)

    def mlp_kernel(xt_ref, slab_ref, out_ref):
        xt = xt_ref[...]      # [2, tile_n]   (row 0 = x, row 1 = t)
        P = slab_ref[...]     # [rows, cols]  packed parameter slab
        x_row = xt[0:1, :]
        t_row = xt[1:2, :]

        # First layer (fan_in == 2): W0 @ [x; t] + b0 without materializing
        # the concat — the two K=1 contractions are plain VPU broadcasts.
        off0, fi0, fo0 = layout[0]
        W0 = P[off0:off0 + fo0, 0:fi0]
        b0 = P[off0:off0 + fo0, fi0:fi0 + 1]
        h = W0[:, 0:1] * x_row + W0[:, 1:2] * t_row + b0  # [fo0, tile_n]
        if num_layers > 1:
            h = jnp.tanh(h)

        # Remaining layers: lane-dense MXU matmuls, f32 accumulation.
        for li in range(1, num_layers):
            off, fi, fo = layout[li]
            W = P[off:off + fo, 0:fi]          # [out, in]
            b = P[off:off + fo, fi:fi + 1]     # [out, 1]
            h = jnp.dot(W, h, preferred_element_type=jnp.float32) + b
            if li < num_layers - 1:
                h = jnp.tanh(h)

        out_ref[...] = h.astype(out_ref.dtype)  # [out_dim, tile_n], lane-dense

    return mlp_kernel


# ----------------------------------------------------------------------------
# Wrapper: pad / pack, one pallas_call over a parallel batch grid, un-pad.
# Intended to be called under jax.jit so the layout plumbing fuses.
# ----------------------------------------------------------------------------
def burger_pinn_forward(x, t, params, *, tile_n=4096):
    """x, t: [N, 1] float32.  Returns u: [N, out_dim] float32."""
    N = x.shape[0]
    out_dim = params[-1][0].shape[0]

    slab, layout = pack_params(params)

    # Choose the batch tile: large to amortize the ~0.35us per-grid-step
    # overhead, but if the whole (lane-rounded) batch fits in one tile, split
    # it in two so the "parallel" grid axis feeds both v7x TensorCores.
    n_lane = _round_up(N, 128)
    if n_lane <= tile_n:
        tile = max(128, _round_up(pl.cdiv(n_lane, 2), 128))
    else:
        tile = tile_n
    grid_n = pl.cdiv(N, tile)
    n_pad = grid_n * tile
    pad = n_pad - N

    # Single stacked [2, n_pad] input: batch on the lane axis, one DMA/step.
    xt = jnp.concatenate([x.reshape(1, N), t.reshape(1, N)], axis=0)
    xt = jnp.pad(xt, ((0, 0), (0, pad)))

    flops = 2 * sum(fi * fo for (_, fi, fo) in layout) * n_pad
    transcendentals = sum(fo for (_, _, fo) in layout[:-1]) * n_pad
    bytes_accessed = 4 * ((2 + out_dim) * n_pad + slab.size)

    out_t = pl.pallas_call(
        _make_mlp_kernel(layout),
        out_shape=jax.ShapeDtypeStruct((out_dim, n_pad), jnp.float32),
        grid=(grid_n,),
        in_specs=[
            pl.BlockSpec((2, tile), lambda i: (0, i)),          # stacked x/t
            pl.BlockSpec(slab.shape, lambda i: (0, 0)),         # param slab
        ],
        out_specs=pl.BlockSpec((out_dim, tile), lambda i: (0, i)),
        compiler_params=pltpu.CompilerParams(
            dimension_semantics=("parallel",),
        ),
        cost_estimate=pl.CostEstimate(
            flops=flops,
            transcendentals=transcendentals,
            bytes_accessed=bytes_accessed,
        ),
    )(xt, slab)

    # Slice off the padded tail and return the PyTorch [N, out_dim] layout.
    # NOTE: padded lanes hold garbage; never reduce over the batch axis
    # in-kernel without masking.
    return out_t[:, :N].T


# ----------------------------------------------------------------------------
# Pure-JAX reference for correctness checking
# ----------------------------------------------------------------------------
def reference_forward(x, t, params):
    h = jnp.concatenate([x, t], axis=1)
    for li, (W, b) in enumerate(params):
        h = h @ W.T + b.T
        if li < len(params) - 1:
            h = jnp.tanh(h)
    return h


if __name__ == "__main__":
    key = jax.random.PRNGKey(0)

    # PINN trunk architecture: 2 -> 32 -> 32 -> 1
    layers = [2, 32, 32, 1]
    key, kp, kx, kt = jax.random.split(key, 4)
    params = init_params(layers, kp)

    fwd = jax.jit(functools.partial(burger_pinn_forward, tile_n=4096))

    # Main check: N a multiple of 128 -> two 512-wide tiles (2 grid steps).
    N = 1024
    x = jax.random.uniform(kx, (N, 1), jnp.float32)
    t = jax.random.uniform(kt, (N, 1), jnp.float32)

    u = jax.block_until_ready(fwd(x, t, params))
    u_ref = reference_forward(x, t, params)
    assert u.shape == (N, 1), u.shape
    assert jnp.allclose(u, u_ref, atol=1e-5, rtol=1e-5), (
        f"max abs diff {jnp.max(jnp.abs(u - u_ref))}"
    )

    # Ragged-batch check: N not a multiple of the tile (padded internally).
    N2 = 1000
    x2, t2 = x[:N2], t[:N2]
    u2 = jax.block_until_ready(fwd(x2, t2, params))
    u2_ref = reference_forward(x2, t2, params)
    assert u2.shape == (N2, 1), u2.shape
    assert jnp.allclose(u2, u2_ref, atol=1e-5, rtol=1e-5), (
        f"max abs diff {jnp.max(jnp.abs(u2 - u2_ref))}"
    )

    # Larger-batch check: exercises the full 4096-wide tile path (grid_n > 1).
    N3 = 10000
    key, kx3, kt3 = jax.random.split(key, 3)
    x3 = jax.random.uniform(kx3, (N3, 1), jnp.float32)
    t3 = jax.random.uniform(kt3, (N3, 1), jnp.float32)
    u3 = jax.block_until_ready(fwd(x3, t3, params))
    u3_ref = reference_forward(x3, t3, params)
    assert u3.shape == (N3, 1), u3.shape
    assert jnp.allclose(u3, u3_ref, atol=1e-5, rtol=1e-5), (
        f"max abs diff {jnp.max(jnp.abs(u3 - u3_ref))}"
    )

    print("KERNEL_OK")
</pallas_src>

<mosaic_0001>
module attributes {stable_mosaic.version = 11 : i64} {
  func.func @mlp_kernel(%arg0: i32, %arg1: memref<2x512xf32, #tpu.memory_space<vmem>>, %arg2: memref<72x128xf32, #tpu.memory_space<vmem>>, %arg3: memref<1x512xf32, #tpu.memory_space<vmem>>) attributes {dimension_semantics = [#tpu.dimension_semantics<parallel>], iteration_bounds = array<i64: 2>, scalar_prefetch = 0 : i64, scratch_operands = 0 : i64, tpu.core_type = #tpu.core_type<tc>, window_params = [{transform_indices = @transform_0, window_bounds = array<i64: 2, 512>}, {pipeline_mode = #tpu.pipeline_mode<synchronous>, transform_indices = @transform_1, window_bounds = array<i64: 72, 128>}, {transform_indices = @transform_2, window_bounds = array<i64: 1, 512>}]} {
    %c0 = arith.constant 0 : index
    %c0_0 = arith.constant 0 : index
    %0 = vector.load %arg1[%c0, %c0_0] : memref<2x512xf32, #tpu.memory_space<vmem>>, vector<2x512xf32>
    %c0_1 = arith.constant 0 : index
    %c0_2 = arith.constant 0 : index
    %1 = vector.load %arg2[%c0_1, %c0_2] : memref<72x128xf32, #tpu.memory_space<vmem>>, vector<72x128xf32>
    %2 = vector.extract_strided_slice %0 {offsets = [0, 0], sizes = [1, 512], strides = [1, 1]} : vector<2x512xf32> to vector<1x512xf32>
    %3 = vector.extract_strided_slice %0 {offsets = [1, 0], sizes = [1, 512], strides = [1, 1]} : vector<2x512xf32> to vector<1x512xf32>
    %4 = vector.extract_strided_slice %1 {offsets = [0, 0], sizes = [32, 2], strides = [1, 1]} : vector<72x128xf32> to vector<32x2xf32>
    %5 = vector.extract_strided_slice %1 {offsets = [0, 2], sizes = [32, 1], strides = [1, 1]} : vector<72x128xf32> to vector<32x1xf32>
    %6 = vector.extract_strided_slice %4 {offsets = [0, 0], sizes = [32, 1], strides = [1, 1]} : vector<32x2xf32> to vector<32x1xf32>
    %7 = vector.broadcast %6 : vector<32x1xf32> to vector<32x512xf32>
    %8 = vector.broadcast %2 : vector<1x512xf32> to vector<32x512xf32>
    %9 = arith.mulf %7, %8 : vector<32x512xf32>
    %10 = vector.extract_strided_slice %4 {offsets = [0, 1], sizes = [32, 1], strides = [1, 1]} : vector<32x2xf32> to vector<32x1xf32>
    %11 = vector.broadcast %10 : vector<32x1xf32> to vector<32x512xf32>
    %12 = vector.broadcast %3 : vector<1x512xf32> to vector<32x512xf32>
    %13 = arith.mulf %11, %12 : vector<32x512xf32>
    %14 = arith.addf %9, %13 : vector<32x512xf32>
    %15 = vector.broadcast %5 : vector<32x1xf32> to vector<32x512xf32>
    %16 = arith.addf %14, %15 : vector<32x512xf32>
    %17 = math.tanh %16 : vector<32x512xf32>
    %18 = vector.extract_strided_slice %1 {offsets = [32, 0], sizes = [32, 32], strides = [1, 1]} : vector<72x128xf32> to vector<32x32xf32>
    %19 = vector.extract_strided_slice %1 {offsets = [32, 32], sizes = [32, 1], strides = [1, 1]} : vector<72x128xf32> to vector<32x1xf32>
    %cst = arith.constant dense<0.000000e+00> : vector<32x512xf32>
    %20 = tpu.matmul %18, %17, %cst {dimension_numbers = #tpu.dot_dimension_numbers<[1], [0], [0], [1], [0, 0, 1, 1], [], []>} : vector<32x32xf32>, vector<32x512xf32>, vector<32x512xf32> -> vector<32x512xf32>
    %21 = vector.broadcast %19 : vector<32x1xf32> to vector<32x512xf32>
    %22 = arith.addf %20, %21 : vector<32x512xf32>
    %23 = math.tanh %22 : vector<32x512xf32>
    %24 = vector.extract_strided_slice %1 {offsets = [64, 0], sizes = [1, 32], strides = [1, 1]} : vector<72x128xf32> to vector<1x32xf32>
    %25 = vector.extract_strided_slice %1 {offsets = [64, 32], sizes = [1, 1], strides = [1, 1]} : vector<72x128xf32> to vector<1x1xf32>
    %cst_3 = arith.constant dense<0.000000e+00> : vector<1x512xf32>
    %26 = tpu.matmul %24, %23, %cst_3 {dimension_numbers = #tpu.dot_dimension_numbers<[1], [0], [0], [1], [0, 0, 1, 1], [], []>} : vector<1x32xf32>, vector<32x512xf32>, vector<1x512xf32> -> vector<1x512xf32>
    %27 = vector.broadcast %25 : vector<1x1xf32> to vector<1x512xf32>
    %28 = arith.addf %26, %27 : vector<1x512xf32>
    %c0_4 = arith.constant 0 : index
    %c0_5 = arith.constant 0 : index
    %29 = vector.load %arg3[%c0_4, %c0_5] : memref<1x512xf32, #tpu.memory_space<vmem>>, vector<1x512xf32>
    tpu.vector_store %arg3[%c0_4, %c0_5], %28 {strides = array<i32>} : memref<1x512xf32, #tpu.memory_space<vmem>>, vector<1x512xf32>,
    return
  }
  func.func @transform_0(%arg0: i32) -> (i32, i32) {
    %c0_i32 = arith.constant 0 : i32
    %c0_i32_0 = arith.constant 0 : i32
    return %c0_i32, %arg0 : i32, i32
  }
  func.func @transform_1(%arg0: i32) -> (i32, i32) {
    %c0_i32 = arith.constant 0 : i32
    %c0_i32_0 = arith.constant 0 : i32
    %c0_i32_1 = arith.constant 0 : i32
    return %c0_i32, %c0_i32_0 : i32, i32
  }
  func.func @transform_2(%arg0: i32) -> (i32, i32) {
    %c0_i32 = arith.constant 0 : i32
    %c0_i32_0 = arith.constant 0 : i32
    return %c0_i32, %arg0 : i32, i32
  }
}

</mosaic_0001>

<llo_original>
// kernel: burger_pinn_forward.1
$region0: #{burger_pinn_forward.1}
  #allocation0 [shape = 'u32[]', space=smem, size = 0x4, offset = 0x4, fixed_abs, tag = 'smem constant byte address 0x4 - core index']
  #allocation1 [shape = 'u32[144,128]{1,0:T(1,128)}', space=vmem, size = 0x12000, scoped, tag = 'internal scratch']
  %s0 = inlined_call_operand.vmem [shape: f32[2,1024], index: 0, kind: input, shape index: {}]
  %s1 = inlined_call_operand.vmem [shape: f32[72,128], index: 1, kind: input, shape index: {}]
  %s2 = inlined_call_operand.hbm [shape: f32[1,1024], index: 2, kind: output, shape index: {}]
  %s3 = sld [smem:[#allocation0]]
  $region41: #{burger_pinn_forward.1} parent=0
    _
  %s5 = ssub.s32 1, %s3
  %s6 = scalar_select 0, %s5, %s3
  $region1: #{burger_pinn_forward.1} parent=0
    #allocation2 [shape = 'u8[4096]{0}', space=vmem, size = 0x1000, scoped, tag = 'output window, operand 0']
    #allocation3 [shape = 's32[2]{0}', space=sflag, size = 0x8, scoped, tag = 'scoped memory for burger_pinn_forward.1']
    %7 = vsyncpa [#allocation3], 0
    %s8 = scalar_lea.sflag [#allocation3], 1
    %9 = vsyncpa %s8, 0
    loop: start=0, step=1, limit=4
    $region2: #{burger_pinn_forward.1} parent=1 // loop_pre_header
      _
    $region3: #{burger_pinn_forward.1} parent=1 // loop_header
      %s11 = sphi 0, %s15
      %p12 = scmp.ge.s32.totalorder %s11, 4
      %s21 = sphi 0, %s23
      %s24 = sphi 0, %s21
      %s25 = sphi 0, %s24
      %s41 = sphi 0, %s25
      %s45 = sphi 0, %s45
      %s47 = sphi 0, %s45
      %s48 = sphi 0, %s47
      %s62 = sphi 0, %s48
      %s68 = sphi 0, %s70
      %s71 = sphi 0, %s68
      %s72 = sphi 0, %s71
      %s88 = sphi 0, %s72
    $region4: #{burger_pinn_forward.1} parent=1 // loop_header_branch
      %14 = sbr.rel (%p12) target = $region8
    $region5: #{burger_pinn_forward.1} parent=1 // loop_body
      %s16 = ssub.s32 %s11, 1
      %s17 = ssub.s32 %s11, 2
      %s18 = sadd.s32 %s11, 1
      %s19 = ssub.s32 %s11, %s18
      %p20 = scmp.eq.s32.totalorder %s19, 0
      %s22 = sadd.s32 %s21, 1
      %s23 = scalar_select %p20, %s21, %s22
      %p26 = pneg %p20
      %p27 = scmp.eq.s32.totalorder %s11, 1
      %p28 = por %p26, %p27
      %p29 = scmp.ne.s32.totalorder %s21, %s24
      %p30 = scmp.eq.s32.totalorder %s11, 0
      %p31 = por %p29, %p30
      %p32 = scmp.ne.s32.totalorder %s21, %s24
      %p33 = scmp.eq.s32.totalorder %s16, 1
      %p34 = por %p32, %p33
      %p35 = scmp.ne.s32.totalorder %s24, %s25
      %p36 = scmp.eq.s32.totalorder %s16, 0
      %p37 = por %p35, %p36
      %p38 = scmp.ne.s32.totalorder %s24, %s25
      %p39 = scmp.eq.s32.totalorder %s17, 1
      %p40 = por %p38, %p39
      %p42 = scmp.ne.s32.totalorder %s25, %s41
      %p43 = scmp.eq.s32.totalorder %s17, 0
      %p44 = por %p42, %p43
      %s46 = sadd.s32 %s45, 1
      %p49 = scmp.eq.s32.totalorder %s11, 1
      %p50 = scmp.ne.s32.totalorder %s45, %s47
      %p51 = scmp.eq.s32.totalorder %s11, 0
      %p52 = por %p50, %p51
      %p53 = scmp.ne.s32.totalorder %s45, %s47
      %p54 = scmp.eq.s32.totalorder %s16, 1
      %p55 = por %p53, %p54
      %p56 = scmp.ne.s32.totalorder %s47, %s48
      %p57 = scmp.eq.s32.totalorder %s16, 0
      %p58 = por %p56, %p57
      %p59 = scmp.ne.s32.totalorder %s47, %s48
      %p60 = scmp.eq.s32.totalorder %s17, 1
      %p61 = por %p59, %p60
      %p63 = scmp.ne.s32.totalorder %s48, %s62
      %p64 = scmp.eq.s32.totalorder %s17, 0
      %p65 = por %p63, %p64
      %s66 = ssub.s32 %s11, %s18
      %p67 = scmp.eq.s32.totalorder %s66, 0
      %s69 = sadd.s32 %s68, 1
      %s70 = scalar_select %p67, %s68, %s69
      %p73 = pneg %p67
      %p74 = scmp.eq.s32.totalorder %s11, 1
      %p75 = por %p73, %p74
      %p76 = scmp.ne.s32.totalorder %s68, %s71
      %p77 = scmp.eq.s32.totalorder %s11, 0
      %p78 = por %p76, %p77
      %p79 = scmp.ne.s32.totalorder %s68, %s71
      %p80 = scmp.eq.s32.totalorder %s16, 1
      %p81 = por %p79, %p80
      %p82 = scmp.ne.s32.totalorder %s71, %s72
      %p83 = scmp.eq.s32.totalorder %s16, 0
      %p84 = por %p82, %p83
      %p85 = scmp.ne.s32.totalorder %s71, %s72
      %p86 = scmp.eq.s32.totalorder %s17, 1
      %p87 = por %p85, %p86
      %p89 = scmp.ne.s32.totalorder %s72, %s88
      %p90 = scmp.eq.s32.totalorder %s17, 0
      %p91 = por %p89, %p90
      %p92 = scmp.le.s32.totalorder 1, %s11
      %p93 = scmp.lt.s32.totalorder %s11, 3
      %p94 = pnand %p92, %p93
      %p95 = pneg %p94
      // Predicated region
      $region9: #{burger_pinn_forward.1} parent=5 // pred_check
        _
      $region10: #{burger_pinn_forward.1} parent=5 // pred_check_branch
        %97 = sbr.rel (%p94) target = $region12
      $region11: #{burger_pinn_forward.1} parent=5 // pred_region
        %s98 = ssub.s32 %s11, 1
        // Predicated region
        $region13: #{burger_pinn_forward.1} parent=11 // pred_check
          %p99 = pneg %p58
        $region14: #{burger_pinn_forward.1} parent=11 // pred_check_branch
          %101 = sbr.rel (%p99) target = $region16
        $region15: #{burger_pinn_forward.1} parent=11 // pred_region
          _
        $region16: #{burger_pinn_forward.1} parent=11 // pred_fallthru
          _
      $region12: #{burger_pinn_forward.1} parent=5 // pred_fallthru
        _
      %p102 = scmp.lt.s32.totalorder %s11, 2
      // Predicated region
      $region17: #{burger_pinn_forward.1} parent=5 // pred_check
        %p103 = pneg %p102
      $region18: #{burger_pinn_forward.1} parent=5 // pred_check_branch
        %105 = sbr.rel (%p103) target = $region20
      $region19: #{burger_pinn_forward.1} parent=5 // pred_region
        // Predicated region
        $region21: #{burger_pinn_forward.1} parent=19 // pred_check
          %p106 = pneg %p31
        $region22: #{burger_pinn_forward.1} parent=19 // pred_check_branch
          %108 = sbr.rel (%p106) target = $region24
        $region23: #{burger_pinn_forward.1} parent=19 // pred_region
          %s109 = smul.u32 4, %s11
          %p110 = scmp.lt.s32.totalorder %s109, 7
          %s111 = scalar_select %p110, %s109, 7
          %s112 = smul.addr %s111, 2
          %s113 = scalar_lea.vmem %s0, %s112
          %s114 = smul.u32 4, %s11
        $region24: #{burger_pinn_forward.1} parent=19 // pred_fallthru
          _
      $region20: #{burger_pinn_forward.1} parent=5 // pred_fallthru
        _
      %p115 = scmp.le.s32.totalorder 1, %s11
      %p116 = scmp.lt.s32.totalorder %s11, 3
      %p117 = pnand %p115, %p116
      %p118 = pneg %p117
      // Predicated region
      $region25: #{burger_pinn_forward.1} parent=5 // pred_check
        _
      $region26: #{burger_pinn_forward.1} parent=5 // pred_check_branch
        %120 = sbr.rel (%p117) target = $region28
      $region27: #{burger_pinn_forward.1} parent=5 // pred_region
        %s121 = ssub.s32 %s11, 1
        %s122 = smul.u32 4, %s16
        %p123 = scmp.lt.s32.totalorder %s122, 7
        %s124 = scalar_select %p123, %s122, 7
        %s125 = smul.addr %s124, 2
        %s126 = scalar_lea.vmem %s0, %s125
        %p127 = pneg %p37
        %p128 = pneg %p34
        %p129 = pneg %p58
        %p130 = pneg %p55
        %p131 = pneg %p84
        %p132 = pneg %p81
        %s133 = sand.u32 %s71, 1
        %s134 = scalar_lea.sflag [#allocation3], %s133
        %s135 = sand.u32 %s71, 1
        %s136 = smul.addr %s135, 4
        %s137 = scalar_lea.vmem [#allocation2], %s136
        %s138 = smul.u32 4, %s16
        %p139 = scmp.lt.s32.totalorder %s138, 7
        %s140 = scalar_select %p139, %s138, 7
        %s141 = smul.addr %s140, 2
        %s142 = scalar_lea.vmem %s0, %s141
        %s143 = smul.u32 4, %s16
        %s144 = smul.u32 4, %s16
        %v145 = vld [vmem:[%s142] sm:$0xff]
        %v146 = vld [vmem:[%s1] sm:$0xff]
        %v147 = vld [vmem:[%s1 + $0x8] sm:$0xff]
        %v148 = vld [vmem:[%s1 + $0x10] sm:$0xff]
        %v149 = vld [vmem:[%s1 + $0x18] sm:$0xff]
        %v150 = vld [vmem:[%s1 + $0x20] sm:$0xff]
        %v151 = vld [vmem:[%s1 + $0x28] sm:$0xff]
        %v152 = vld [vmem:[%s1 + $0x30] sm:$0xff]
        %v153 = vld [vmem:[%s1 + $0x38] sm:$0xff]
        %v154 = vld [vmem:[%s1 + $0x40] sm:$0xff]
        %156 = vset.pattern.permute.xlu0 0
        %157 = vperm.xlu0 %156, %v146
        %v158 = vpop.permute.xlu0 %157
        %161 = vset.pattern.permute.xlu0 0
        %162 = vperm.xlu0 %161, %v147
        %v163 = vpop.permute.xlu0 %162
        %166 = vset.pattern.permute.xlu0 0
        %167 = vperm.xlu0 %166, %v148
        %v168 = vpop.permute.xlu0 %167
        %171 = vset.pattern.permute.xlu0 0
        %172 = vperm.xlu0 %171, %v149
        %v173 = vpop.permute.xlu0 %172
        %v176 = vlaneseq
        %v177 = vshrl.u32 %v176, 7
        %v178 = vsub.s32 0, %v177
        %v179 = vrot.slane %v145, %v178
        %v180 = vlaneseq
        %v181 = vshrl.u32 %v180, 7
        %v182 = vsub.s32 2, %v181
        %v183 = vrot.slane %v145, %v182
        %v184 = vlaneseq
        %v185 = vshrl.u32 %v184, 7
        %v186 = vsub.s32 4, %v185
        %v187 = vrot.slane %v145, %v186
        %v188 = vlaneseq
        %v189 = vshrl.u32 %v188, 7
        %v190 = vsub.s32 6, %v189
        %v191 = vrot.slane %v145, %v190
        %v196 = vlaneseq
        %v197 = vshrl.u32 %v196, 7
        %v198 = vsub.s32 0, %v197
        %v199 = vrot.slane %v179, %v198
        %v200 = vlaneseq
        %v201 = vshrl.u32 %v200, 7
        %v202 = vsub.s32 0, %v201
        %v203 = vrot.slane %v183, %v202
        %v204 = vlaneseq
        %v205 = vshrl.u32 %v204, 7
        %v206 = vsub.s32 0, %v205
        %v207 = vrot.slane %v187, %v206
        %v208 = vlaneseq
        %v209 = vshrl.u32 %v208, 7
        %v210 = vsub.s32 0, %v209
        %v211 = vrot.slane %v191, %v210
        %v212 = vmul.f32 %v158, %v199
        %v213 = vmul.f32 %v158, %v203
        %v214 = vmul.f32 %v158, %v207
        %v215 = vmul.f32 %v158, %v211
        %v216 = vmul.f32 %v163, %v199
        %v217 = vmul.f32 %v163, %v203
        %v218 = vmul.f32 %v163, %v207
        %v219 = vmul.f32 %v163, %v211
        %v220 = vmul.f32 %v168, %v199
        %v221 = vmul.f32 %v168, %v203
        %v222 = vmul.f32 %v168, %v207
        %v223 = vmul.f32 %v168, %v211
        %v224 = vmul.f32 %v173, %v199
        %v225 = vmul.f32 %v173, %v203
        %v226 = vmul.f32 %v173, %v207
        %v227 = vmul.f32 %v173, %v211
        %228 = vset.pattern.permute.xlu0 1
        %229 = vperm.xlu0 %228, %v146
        %v230 = vpop.permute.xlu0 %229
        %232 = vset.pattern.permute.xlu0 1
        %233 = vperm.xlu0 %232, %v147
        %v234 = vpop.permute.xlu0 %233
        %236 = vset.pattern.permute.xlu0 1
        %237 = vperm.xlu0 %236, %v148
        %v238 = vpop.permute.xlu0 %237
        %240 = vset.pattern.permute.xlu0 1
        %241 = vperm.xlu0 %240, %v149
        %v242 = vpop.permute.xlu0 %241
        %v244 = vlaneseq
        %v245 = vshrl.u32 %v244, 7
        %v246 = vsub.s32 1, %v245
        %v247 = vrot.slane %v145, %v246
        %v248 = vlaneseq
        %v249 = vshrl.u32 %v248, 7
        %v250 = vsub.s32 3, %v249
        %v251 = vrot.slane %v145, %v250
        %v252 = vlaneseq
        %v253 = vshrl.u32 %v252, 7
        %v254 = vsub.s32 5, %v253
        %v255 = vrot.slane %v145, %v254
        %v256 = vlaneseq
        %v257 = vshrl.u32 %v256, 7
        %v258 = vsub.s32 7, %v257
        %v259 = vrot.slane %v145, %v258
        %v264 = vlaneseq
        %v265 = vshrl.u32 %v264, 7
        %v266 = vsub.s32 1, %v265
        %v267 = vrot.slane %v247, %v266
        %v268 = vlaneseq
        %v269 = vshrl.u32 %v268, 7
        %v270 = vsub.s32 1, %v269
        %v271 = vrot.slane %v251, %v270
        %v272 = vlaneseq
        %v273 = vshrl.u32 %v272, 7
        %v274 = vsub.s32 1, %v273
        %v275 = vrot.slane %v255, %v274
        %v276 = vlaneseq
        %v277 = vshrl.u32 %v276, 7
        %v278 = vsub.s32 1, %v277
        %v279 = vrot.slane %v259, %v278
        %v280 = vmul.f32 %v230, %v267
        %v281 = vmul.f32 %v230, %v271
        %v282 = vmul.f32 %v230, %v275
        %v283 = vmul.f32 %v230, %v279
        %v284 = vmul.f32 %v234, %v267
        %v285 = vmul.f32 %v234, %v271
        %v286 = vmul.f32 %v234, %v275
        %v287 = vmul.f32 %v234, %v279
        %v288 = vmul.f32 %v238, %v267
        %v289 = vmul.f32 %v238, %v271
        %v290 = vmul.f32 %v238, %v275
        %v291 = vmul.f32 %v238, %v279
        %v292 = vmul.f32 %v242, %v267
        %v293 = vmul.f32 %v242, %v271
        %v294 = vmul.f32 %v242, %v275
        %v295 = vmul.f32 %v242, %v279
        %v296 = vadd.f32 %v212, %v280
        %v297 = vadd.f32 %v213, %v281
        %v298 = vadd.f32 %v214, %v282
        %v299 = vadd.f32 %v215, %v283
        %v300 = vadd.f32 %v216, %v284
        %v301 = vadd.f32 %v217, %v285
        %v302 = vadd.f32 %v218, %v286
        %v303 = vadd.f32 %v219, %v287
        %v304 = vadd.f32 %v220, %v288
        %v305 = vadd.f32 %v221, %v289
        %v306 = vadd.f32 %v222, %v290
        %v307 = vadd.f32 %v223, %v291
        %v308 = vadd.f32 %v224, %v292
        %v309 = vadd.f32 %v225, %v293
        %v310 = vadd.f32 %v226, %v294
        %v311 = vadd.f32 %v227, %v295
        %312 = vset.pattern.permute.xlu0 2
        %313 = vperm.xlu0 %312, %v146
        %v314 = vpop.permute.xlu0 %313
        %316 = vset.pattern.permute.xlu0 2
        %317 = vperm.xlu0 %316, %v147
        %v318 = vpop.permute.xlu0 %317
        %320 = vset.pattern.permute.xlu0 2
        %321 = vperm.xlu0 %320, %v148
        %v322 = vpop.permute.xlu0 %321
        %324 = vset.pattern.permute.xlu0 2
        %325 = vperm.xlu0 %324, %v149
        %v326 = vpop.permute.xlu0 %325
        %v328 = vadd.f32 %v296, %v314
        %v329 = vadd.f32 %v297, %v314
        %v330 = vadd.f32 %v298, %v314
        %v331 = vadd.f32 %v299, %v314
        %v332 = vadd.f32 %v300, %v318
        %v333 = vadd.f32 %v301, %v318
        %v334 = vadd.f32 %v302, %v318
        %v335 = vadd.f32 %v303, %v318
        %v336 = vadd.f32 %v304, %v322
        %v337 = vadd.f32 %v305, %v322
        %v338 = vadd.f32 %v306, %v322
        %v339 = vadd.f32 %v307, %v322
        %v340 = vadd.f32 %v308, %v326
        %v341 = vadd.f32 %v309, %v326
        %v342 = vadd.f32 %v310, %v326
        %v343 = vadd.f32 %v311, %v326
        %v344 = vtanh.pop %v328
        %v345 = vtanh.pop %v329
        %v346 = vtanh.pop %v330
        %v347 = vtanh.pop %v331
        %v348 = vtanh.pop %v332
        %v349 = vtanh.pop %v333
        %v350 = vtanh.pop %v334
        %v351 = vtanh.pop %v335
        %v352 = vtanh.pop %v336
        %v353 = vtanh.pop %v337
        %v354 = vtanh.pop %v338
        %v355 = vtanh.pop %v339
        %v356 = vtanh.pop %v340
        %v357 = vtanh.pop %v341
        %v358 = vtanh.pop %v342
        %v359 = vtanh.pop %v343
        %361 = vset.pattern.permute.xlu0 32
        %362 = vperm.xlu0 %361, %v150
        %v363 = vpop.permute.xlu0 %362
        %366 = vset.pattern.permute.xlu0 32
        %367 = vperm.xlu0 %366, %v151
        %v368 = vpop.permute.xlu0 %367
        %371 = vset.pattern.permute.xlu0 32
        %372 = vperm.xlu0 %371, %v152
        %v373 = vpop.permute.xlu0 %372
        %376 = vset.pattern.permute.xlu0 32
        %377 = vperm.xlu0 %376, %v153
        %v378 = vpop.permute.xlu0 %377
        %vm380 = vcmask 261120
        %v381 = vsel %vm380, %v150, 0
        %v383 = vsel %vm380, %v151, 0
        %v385 = vsel %vm380, %v152, 0
        %v387 = vsel %vm380, %v153, 0
        %389 = vmatprep.subr.mxu0 %v345
        %390 = vmatpush1.msra.mxu0 %v344
        %391 = vmatprep.subr.mxu0 %v349
        %392 = vmatpush1.msra.mxu0 %v348
        %393 = vmatprep.subr.mxu0 %v353
        %394 = vmatpush1.msra.mxu0 %v352
        %395 = vmatprep.subr.mxu0 %v357
        %396 = vmatpush1.msra.mxu0 %v356
        %397 = vmatprep.subr.mxu0 0.0
        %398 = vmatpush1.msra.mxu0 0.0
        %399 = vmatprep.subr.mxu0 0.0
        %400 = vmatpush1.msra.mxu0 0.0
        %401 = vmatprep.subr.mxu0 0.0
        %402 = vmatpush1.msra.mxu0 0.0
        %403 = vmatprep.subr.mxu0 0.0
        %404 = vmatpush1.msra.mxu0 0.0
        %405 = vmatprep.subr.mxu0 0.0
        %406 = vmatpush1.msra.mxu0 0.0
        %407 = vmatprep.subr.mxu0 0.0
        %408 = vmatpush1.msra.mxu0 0.0
        %409 = vmatprep.subr.mxu0 0.0
        %410 = vmatpush1.msra.mxu0 0.0
        %411 = vmatprep.subr.mxu0 0.0
        %412 = vmatpush1.msra.mxu0 0.0
        %413 = vmatprep.subr.mxu0 0.0
        %414 = vmatpush1.msra.mxu0 0.0
        %415 = vmatprep.subr.mxu0 0.0
        %416 = vmatpush1.msra.mxu0 0.0
        %417 = vmatprep.subr.mxu0 0.0
        %418 = vmatpush1.msra.mxu0 0.0
        %419 = vmatprep.subr.mxu0 0.0
        %420 = vmatpush1.msra.mxu0 0.0
        %421 = vmatprep.subr.mxu0 0.0
        %422 = vmatpush1.msra.mxu0 0.0
        %423 = vmatprep.subr.mxu0 0.0
        %424 = vmatpush1.msra.mxu0 0.0
        %425 = vmatprep.subr.mxu0 0.0
        %426 = vmatpush1.msra.mxu0 0.0
        %427 = vmatprep.subr.mxu0 0.0
        %428 = vmatpush1.msra.mxu0 0.0
        %429 = vmatprep.subr.mxu0 0.0
        %430 = vmatpush1.msra.mxu0 0.0
        %431 = vmatprep.subr.mxu0 0.0
        %432 = vmatpush1.msra.mxu0 0.0
        %433 = vmatprep.subr.mxu0 0.0
        %434 = vmatpush1.msra.mxu0 0.0
        %435 = vmatprep.subr.mxu0 0.0
        %436 = vmatpush1.msra.mxu0 0.0
        %437 = vmatprep.subr.mxu0 0.0
        %438 = vmatpush1.msra.mxu0 0.0
        %439 = vmatprep.subr.mxu0 0.0
        %440 = vmatpush1.msra.mxu0 0.0
        %441 = vmatprep.subr.mxu0 0.0
        %442 = vmatpush1.msra.mxu0 0.0
        %443 = vmatprep.subr.mxu0 0.0
        %444 = vmatpush1.msra.mxu0 0.0
        %445 = vmatprep.subr.mxu0 0.0
        %446 = vmatpush1.msra.mxu0 0.0
        %447 = vmatprep.subr.mxu0 0.0
        %448 = vmatpush1.msra.mxu0 0.0
        %449 = vmatprep.subr.mxu0 0.0
        %450 = vmatpush1.msra.mxu0 0.0
        %451 = vmatprep.subr.mxu0 0.0
        %452 = vmatpush1.msra.mxu0 0.0
        %453 = vmatprep.mubr.f32.mxu0 0.0
        %454 = vmatmul.mubr.f32.gmra.mrb[0].mxu0 %v381
        %v455 = vpop.f32.mrb[0].mxu0
        %v456 = vadd.f32 %v363, %v455
        %v457 = vpop.f32.mrb[0].mxu0
        %v458 = vadd.f32 %v363, %v457
        %459 = vmatprep.mubr.f32.mxu0 0.0
        %460 = vmatmul.mubr.f32.gmra.mrb[0].mxu0 %v383
        %v461 = vpop.f32.mrb[0].mxu0
        %v462 = vadd.f32 %v368, %v461
        %v463 = vpop.f32.mrb[0].mxu0
        %v464 = vadd.f32 %v368, %v463
        %465 = vmatprep.mubr.f32.mxu0 0.0
        %466 = vmatmul.mubr.f32.gmra.mrb[0].mxu0 %v385
        %v467 = vpop.f32.mrb[0].mxu0
        %v468 = vadd.f32 %v373, %v467
        %v469 = vpop.f32.mrb[0].mxu0
        %v470 = vadd.f32 %v373, %v469
        %471 = vmatprep.mubr.f32.mxu0 0.0
        %472 = vmatmul.mubr.f32.gmra.mrb[0].mxu0 %v387
        %v473 = vpop.f32.mrb[0].mxu0
        %v474 = vadd.f32 %v378, %v473
        %v475 = vpop.f32.mrb[0].mxu0
        %v476 = vadd.f32 %v378, %v475
        %477 = vdwg.mxu0
        %478 = vmatprep.subr.mxu0 %v347
        %479 = vmatpush1.msra.mxu0 %v346
        %480 = vmatprep.subr.mxu0 %v351
        %481 = vmatpush1.msra.mxu0 %v350
        %482 = vmatprep.subr.mxu0 %v355
        %483 = vmatpush1.msra.mxu0 %v354
        %484 = vmatprep.subr.mxu0 %v359
        %485 = vmatpush1.msra.mxu0 %v358
        %486 = vmatprep.subr.mxu0 0.0
        %487 = vmatpush1.msra.mxu0 0.0
        %488 = vmatprep.subr.mxu0 0.0
        %489 = vmatpush1.msra.mxu0 0.0
        %490 = vmatprep.subr.mxu0 0.0
        %491 = vmatpush1.msra.mxu0 0.0
        %492 = vmatprep.subr.mxu0 0.0
        %493 = vmatpush1.msra.mxu0 0.0
        %494 = vmatprep.subr.mxu0 0.0
        %495 = vmatpush1.msra.mxu0 0.0
        %496 = vmatprep.subr.mxu0 0.0
        %497 = vmatpush1.msra.mxu0 0.0
        %498 = vmatprep.subr.mxu0 0.0
        %499 = vmatpush1.msra.mxu0 0.0
        %500 = vmatprep.subr.mxu0 0.0
        %501 = vmatpush1.msra.mxu0 0.0
        %502 = vmatprep.subr.mxu0 0.0
        %503 = vmatpush1.msra.mxu0 0.0
        %504 = vmatprep.subr.mxu0 0.0
        %505 = vmatpush1.msra.mxu0 0.0
        %506 = vmatprep.subr.mxu0 0.0
        %507 = vmatpush1.msra.mxu0 0.0
        %508 = vmatprep.subr.mxu0 0.0
        %509 = vmatpush1.msra.mxu0 0.0
        %510 = vmatprep.subr.mxu0 0.0
        %511 = vmatpush1.msra.mxu0 0.0
        %512 = vmatprep.subr.mxu0 0.0
        %513 = vmatpush1.msra.mxu0 0.0
        %514 = vmatprep.subr.mxu0 0.0
        %515 = vmatpush1.msra.mxu0 0.0
        %516 = vmatprep.subr.mxu0 0.0
        %517 = vmatpush1.msra.mxu0 0.0
        %518 = vmatprep.subr.mxu0 0.0
        %519 = vmatpush1.msra.mxu0 0.0
        %520 = vmatprep.subr.mxu0 0.0
        %521 = vmatpush1.msra.mxu0 0.0
        %522 = vmatprep.subr.mxu0 0.0
        %523 = vmatpush1.msra.mxu0 0.0
        %524 = vmatprep.subr.mxu0 0.0
        %525 = vmatpush1.msra.mxu0 0.0
        %526 = vmatprep.subr.mxu0 0.0
        %527 = vmatpush1.msra.mxu0 0.0
        %528 = vmatprep.subr.mxu0 0.0
        %529 = vmatpush1.msra.mxu0 0.0
        %530 = vmatprep.subr.mxu0 0.0
        %531 = vmatpush1.msra.mxu0 0.0
        %532 = vmatprep.subr.mxu0 0.0
        %533 = vmatpush1.msra.mxu0 0.0
        %534 = vmatprep.subr.mxu0 0.0
        %535 = vmatpush1.msra.mxu0 0.0
        %536 = vmatprep.subr.mxu0 0.0
        %537 = vmatpush1.msra.mxu0 0.0
        %538 = vmatprep.subr.mxu0 0.0
        %539 = vmatpush1.msra.mxu0 0.0
        %540 = vmatprep.subr.mxu0 0.0
        %541 = vmatpush1.msra.mxu0 0.0
        %542 = vmatprep.mubr.f32.mxu0 0.0
        %543 = vmatmul.mubr.f32.gmra.mrb[0].mxu0 %v381
        %v544 = vpop.f32.mrb[0].mxu0
        %v545 = vadd.f32 %v363, %v544
        %v546 = vpop.f32.mrb[0].mxu0
        %v547 = vadd.f32 %v363, %v546
        %548 = vmatprep.mubr.f32.mxu0 0.0
        %549 = vmatmul.mubr.f32.gmra.mrb[0].mxu0 %v383
        %v550 = vpop.f32.mrb[0].mxu0
        %v551 = vadd.f32 %v368, %v550
        %v552 = vpop.f32.mrb[0].mxu0
        %v553 = vadd.f32 %v368, %v552
        %554 = vmatprep.mubr.f32.mxu0 0.0
        %555 = vmatmul.mubr.f32.gmra.mrb[0].mxu0 %v385
        %v556 = vpop.f32.mrb[0].mxu0
        %v557 = vadd.f32 %v373, %v556
        %v558 = vpop.f32.mrb[0].mxu0
        %v559 = vadd.f32 %v373, %v558
        %560 = vmatprep.mubr.f32.mxu0 0.0
        %561 = vmatmul.mubr.f32.gmra.mrb[0].mxu0 %v387
        %v562 = vpop.f32.mrb[0].mxu0
        %v563 = vadd.f32 %v378, %v562
        %v564 = vpop.f32.mrb[0].mxu0
        %v565 = vadd.f32 %v378, %v564
        %566 = vdwg.mxu0
        %v567 = vtanh.pop %v456
        %v568 = vtanh.pop %v458
        %v569 = vtanh.pop %v545
        %v570 = vtanh.pop %v547
        %v571 = vtanh.pop %v462
        %v572 = vtanh.pop %v464
        %v573 = vtanh.pop %v551
        %v574 = vtanh.pop %v553
        %v575 = vtanh.pop %v468
        %v576 = vtanh.pop %v470
        %v577 = vtanh.pop %v557
        %v578 = vtanh.pop %v559
        %v579 = vtanh.pop %v474
        %v580 = vtanh.pop %v476
        %v581 = vtanh.pop %v563
        %v582 = vtanh.pop %v565
        %584 = vset.pattern.permute.xlu0 32
        %585 = vperm.xlu0 %584, %v154
        %v586 = vpop.permute.xlu0 %585
        %v588 = vsel %vm380, %v154, 0
        %590 = vmatprep.subr.mxu0 %v568
        %591 = vmatpush1.msra.mxu0 %v567
        %592 = vmatprep.subr.mxu0 %v572
        %593 = vmatpush1.msra.mxu0 %v571
        %594 = vmatprep.subr.mxu0 %v576
        %595 = vmatpush1.msra.mxu0 %v575
        %596 = vmatprep.subr.mxu0 %v580
        %597 = vmatpush1.msra.mxu0 %v579
        %598 = vmatprep.subr.mxu0 0.0
        %599 = vmatpush1.msra.mxu0 0.0
        %600 = vmatprep.subr.mxu0 0.0
        %601 = vmatpush1.msra.mxu0 0.0
        %602 = vmatprep.subr.mxu0 0.0
        %603 = vmatpush1.msra.mxu0 0.0
        %604 = vmatprep.subr.mxu0 0.0
        %605 = vmatpush1.msra.mxu0 0.0
        %606 = vmatprep.subr.mxu0 0.0
        %607 = vmatpush1.msra.mxu0 0.0
        %608 = vmatprep.subr.mxu0 0.0
        %609 = vmatpush1.msra.mxu0 0.0
        %610 = vmatprep.subr.mxu0 0.0
        %611 = vmatpush1.msra.mxu0 0.0
        %612 = vmatprep.subr.mxu0 0.0
        %613 = vmatpush1.msra.mxu0 0.0
        %614 = vmatprep.subr.mxu0 0.0
        %615 = vmatpush1.msra.mxu0 0.0
        %616 = vmatprep.subr.mxu0 0.0
        %617 = vmatpush1.msra.mxu0 0.0
        %618 = vmatprep.subr.mxu0 0.0
        %619 = vmatpush1.msra.mxu0 0.0
        %620 = vmatprep.subr.mxu0 0.0
        %621 = vmatpush1.msra.mxu0 0.0
        %622 = vmatprep.subr.mxu0 0.0
        %623 = vmatpush1.msra.mxu0 0.0
        %624 = vmatprep.subr.mxu0 0.0
        %625 = vmatpush1.msra.mxu0 0.0
        %626 = vmatprep.subr.mxu0 0.0
        %627 = vmatpush1.msra.mxu0 0.0
        %628 = vmatprep.subr.mxu0 0.0
        %629 = vmatpush1.msra.mxu0 0.0
        %630 = vmatprep.subr.mxu0 0.0
        %631 = vmatpush1.msra.mxu0 0.0
        %632 = vmatprep.subr.mxu0 0.0
        %633 = vmatpush1.msra.mxu0 0.0
        %634 = vmatprep.subr.mxu0 0.0
        %635 = vmatpush1.msra.mxu0 0.0
        %636 = vmatprep.subr.mxu0 0.0
        %637 = vmatpush1.msra.mxu0 0.0
        %638 = vmatprep.subr.mxu0 0.0
        %639 = vmatpush1.msra.mxu0 0.0
        %640 = vmatprep.subr.mxu0 0.0
        %641 = vmatpush1.msra.mxu0 0.0
        %642 = vmatprep.subr.mxu0 0.0
        %643 = vmatpush1.msra.mxu0 0.0
        %644 = vmatprep.subr.mxu0 0.0
        %645 = vmatpush1.msra.mxu0 0.0
        %646 = vmatprep.subr.mxu0 0.0
        %647 = vmatpush1.msra.mxu0 0.0
        %648 = vmatprep.subr.mxu0 0.0
        %649 = vmatpush1.msra.mxu0 0.0
        %650 = vmatprep.subr.mxu0 0.0
        %651 = vmatpush1.msra.mxu0 0.0
        %652 = vmatprep.subr.mxu0 0.0
        %653 = vmatpush1.msra.mxu0 0.0
        %654 = vmatprep.mubr.f32.mxu0 0.0
        %655 = vmatmul.mubr.f32.gmra.mrb[0].mxu0 %v588
        %v656 = vpop.f32.mrb[0].mxu0
        %v657 = vadd.f32 %v586, %v656
        %v658 = vpop.f32.mrb[0].mxu0
        %v659 = vadd.f32 %v586, %v658
        %660 = vdwg.mxu0
        %661 = vmatprep.subr.mxu0 %v570
        %662 = vmatpush1.msra.mxu0 %v569
        %663 = vmatprep.subr.mxu0 %v574
        %664 = vmatpush1.msra.mxu0 %v573
        %665 = vmatprep.subr.mxu0 %v578
        %666 = vmatpush1.msra.mxu0 %v577
        %667 = vmatprep.subr.mxu0 %v582
        %668 = vmatpush1.msra.mxu0 %v581
        %669 = vmatprep.subr.mxu0 0.0
        %670 = vmatpush1.msra.mxu0 0.0
        %671 = vmatprep.subr.mxu0 0.0
        %672 = vmatpush1.msra.mxu0 0.0
        %673 = vmatprep.subr.mxu0 0.0
        %674 = vmatpush1.msra.mxu0 0.0
        %675 = vmatprep.subr.mxu0 0.0
        %676 = vmatpush1.msra.mxu0 0.0
        %677 = vmatprep.subr.mxu0 0.0
        %678 = vmatpush1.msra.mxu0 0.0
        %679 = vmatprep.subr.mxu0 0.0
        %680 = vmatpush1.msra.mxu0 0.0
        %681 = vmatprep.subr.mxu0 0.0
        %682 = vmatpush1.msra.mxu0 0.0
        %683 = vmatprep.subr.mxu0 0.0
        %684 = vmatpush1.msra.mxu0 0.0
        %685 = vmatprep.subr.mxu0 0.0
        %686 = vmatpush1.msra.mxu0 0.0
        %687 = vmatprep.subr.mxu0 0.0
        %688 = vmatpush1.msra.mxu0 0.0
        %689 = vmatprep.subr.mxu0 0.0
        %690 = vmatpush1.msra.mxu0 0.0
        %691 = vmatprep.subr.mxu0 0.0
        %692 = vmatpush1.msra.mxu0 0.0
        %693 = vmatprep.subr.mxu0 0.0
        %694 = vmatpush1.msra.mxu0 0.0
        %695 = vmatprep.subr.mxu0 0.0
        %696 = vmatpush1.msra.mxu0 0.0
        %697 = vmatprep.subr.mxu0 0.0
        %698 = vmatpush1.msra.mxu0 0.0
        %699 = vmatprep.subr.mxu0 0.0
        %700 = vmatpush1.msra.mxu0 0.0
        %701 = vmatprep.subr.mxu0 0.0
        %702 = vmatpush1.msra.mxu0 0.0
        %703 = vmatprep.subr.mxu0 0.0
        %704 = vmatpush1.msra.mxu0 0.0
        %705 = vmatprep.subr.mxu0 0.0
        %706 = vmatpush1.msra.mxu0 0.0
        %707 = vmatprep.subr.mxu0 0.0
        %708 = vmatpush1.msra.mxu0 0.0
        %709 = vmatprep.subr.mxu0 0.0
        %710 = vmatpush1.msra.mxu0 0.0
        %711 = vmatprep.subr.mxu0 0.0
        %712 = vmatpush1.msra.mxu0 0.0
        %713 = vmatprep.subr.mxu0 0.0
        %714 = vmatpush1.msra.mxu0 0.0
        %715 = vmatprep.subr.mxu0 0.0
        %716 = vmatpush1.msra.mxu0 0.0
        %717 = vmatprep.subr.mxu0 0.0
        %718 = vmatpush1.msra.mxu0 0.0
        %719 = vmatprep.subr.mxu0 0.0
        %720 = vmatpush1.msra.mxu0 0.0
        %721 = vmatprep.subr.mxu0 0.0
        %722 = vmatpush1.msra.mxu0 0.0
        %723 = vmatprep.subr.mxu0 0.0
        %724 = vmatpush1.msra.mxu0 0.0
        %725 = vmatprep.mubr.f32.mxu0 0.0
        %726 = vmatmul.mubr.f32.gmra.mrb[0].mxu0 %v588
        %v727 = vpop.f32.mrb[0].mxu0
        %v728 = vadd.f32 %v586, %v727
        %v729 = vpop.f32.mrb[0].mxu0
        %v730 = vadd.f32 %v586, %v729
        %731 = vdwg.mxu0
        %v736 = vcombine.low %v657, %v659
        %v737 = vcombine.low %v728, %v730
        %v739 = vunpack.c.l.s4 1966171168
        %v740 = vunpack.c.0.s8 %v739
        %v741 = vlaneseq
        %v742 = vshrl.u32 %v741, 7
        %v743 = vsub.s32 %v740, %v742
        %v744 = vrot.slane %v736, %v743
        %v746 = vunpack.c.l.s4 1966171168
        %v747 = vunpack.c.0.s8 %v746
        %v748 = vlaneseq
        %v749 = vshrl.u32 %v748, 7
        %v750 = vsub.s32 %v747, %v749
        %v751 = vrot.slane %v737, %v750
        %v752 = vcombine.low %v744, %v751
        %v754 = vunpack.c.l.s4 1966171168
        %v755 = vunpack.c.0.s8 %v754
        %v756 = vlaneseq
        %v757 = vshrl.u32 %v756, 7
        %v758 = vsub.s32 %v755, %v757
        %v759 = vrot.slane %v752, %v758
        %v761 = vlaneseq
        %vm762 = vcmp.ge.s32.totalorder %v761, 0
        %vm763 = vcmp.lt.s32.totalorder %v761, 512
        %vm764 = vmand %vm762, %vm763
        %765 = vst.msk [vmem:[%s137] sm:$0xf] %vm764, %v759
        %s766 = sand.u32 %s71, 1
        %s767 = scalar_lea.sflag [#allocation3], %s766
        %s768 = sand.u32 %s71, 1
        %s769 = smul.addr %s768, 4
        %s770 = scalar_lea.vmem [#allocation2], %s769
        // Predicated region
        $region29: #{burger_pinn_forward.1} parent=27 // pred_check
          %p771 = pneg %p81
        $region30: #{burger_pinn_forward.1} parent=27 // pred_check_branch
          %773 = sbr.rel (%p771) target = $region32
        $region31: #{burger_pinn_forward.1} parent=27 // pred_region
          %s774 = smul.u32 4, %s16
          %s776 = ssub.s32 64, 64
          %777 = vsyncadd %s767, %s776
          %s778 = smul.addr %s774, 16
          %s779 = scalar_lea.hbm %s2, %s778
          %s781 = sshll.u32 %s770, 4
          %s782 = int_to_ptr.vmem [resolvable:$true] %s781
          %784 = dma.vmem_to_hbm [thread:$0]  %s782, 64, %s779, %s767
        $region32: #{burger_pinn_forward.1} parent=27 // pred_fallthru
          _
      $region28: #{burger_pinn_forward.1} parent=5 // pred_fallthru
        _
      %p785 = scmp.le.s32.totalorder 2, %s11
      // Predicated region
      $region33: #{burger_pinn_forward.1} parent=5 // pred_check
        %p786 = pneg %p785
      $region34: #{burger_pinn_forward.1} parent=5 // pred_check_branch
        %788 = sbr.rel (%p786) target = $region36
      $region35: #{burger_pinn_forward.1} parent=5 // pred_region
        %s789 = ssub.s32 %s11, 2
        // Predicated region
        $region37: #{burger_pinn_forward.1} parent=35 // pred_check
          %p790 = pneg %p87
        $region38: #{burger_pinn_forward.1} parent=35 // pred_check_branch
          %792 = sbr.rel (%p790) target = $region40
        $region39: #{burger_pinn_forward.1} parent=35 // pred_region
          %s793 = sand.u32 %s72, 1
          %s794 = scalar_lea.sflag [#allocation3], %s793
          %s795 = sand.u32 %s72, 1
          %s796 = smul.addr %s795, 4
          %s797 = scalar_lea.vmem [#allocation2], %s796
          %798 = dma.done %s794, 64
        $region40: #{burger_pinn_forward.1} parent=35 // pred_fallthru
          _
      $region36: #{burger_pinn_forward.1} parent=5 // pred_fallthru
        _
    $region6: #{burger_pinn_forward.1} parent=1 // loop_footer
      %s15 = sadd.s32 1, %s11
    $region7: #{burger_pinn_forward.1} parent=1 // loop_footer_branch
      %10 = sbr.rel target = $region3
    $region8: #{burger_pinn_forward.1} parent=1 // loop_exit
      _
    %799 = vsyncpa [#allocation3], 1
    %s800 = scalar_lea.sflag [#allocation3], 1
    %801 = vsyncpa %s800, 1

</llo_original>
